<compile_context>
chip_gen: v7x
topology: tpu7x:2x2x1
jax: 0.10.0
libtpu: 0.0.40
codegen_flags: <defaults>
</compile_context>

<pallas_src>
import jax
import jax.numpy as jnp
from jax.experimental import pallas as pl
from jax.experimental.pallas import tpu as pltpu


def _leaky_relu(x, slope=0.2):
    return jnp.where(x > 0, x, slope * x)


def _stable_sigmoid(x):
    # numerically stable sigmoid with a single divide (exp on EUP, rest on VPU)
    z = jnp.exp(-jnp.abs(x))
    return jnp.where(x >= 0, 1.0, z) / (1.0 + z)


def discriminator_kernel(x_ref, w0_ref, b0_ref, w1_ref, b1_ref, w2_ref, b2_ref, o_ref):
    """One batch tile: (Linear + LeakyReLU) x2 -> Linear(hid->1) -> Sigmoid."""
    # Layer 0: Linear(emb -> hid) + LeakyReLU(0.2)   (bf16 MXU, f32 accumulate)
    h = jnp.dot(x_ref[...], w0_ref[...], preferred_element_type=jnp.float32)
    h = _leaky_relu(h + b0_ref[...])
    # TODO(synk): nn.Dropout(dis_dropout) omitted — identity under eval/inference semantics.

    # Layer 1: Linear(hid -> hid) + LeakyReLU(0.2)
    h = jnp.dot(h.astype(jnp.bfloat16), w1_ref[...], preferred_element_type=jnp.float32)
    h = _leaky_relu(h + b1_ref[...])

    # Layer 2: Linear(hid -> 1) + Sigmoid, as elementwise mul + lane reduce (VPU + XLU).
    logit = jnp.sum(h * w2_ref[...], axis=-1, keepdims=True) + b2_ref[...]
    o_ref[...] = _stable_sigmoid(logit)


def _round_up(n, m):
    return (n + m - 1) // m * m


def _padded_block_bytes(shape, dtype):
    item = jnp.dtype(dtype).itemsize
    sub_mult = 8 * max(1, 4 // item)           # 8 sublanes for f32, 16 for bf16
    return _round_up(shape[-2], sub_mult) * _round_up(shape[-1], 128) * item


def discriminator_forward(x, params, *, tile_b=None):
    """x: (B, emb_dim) float32. Returns (B,) float32 probabilities."""
    B, emb_dim = x.shape
    (w0, b0), (w1, b1), (w2, b2) = params
    hid = w0.shape[1]

    # Batch tile: large enough to feed the MXU rows, multiple of 8 (sublane constraint),
    # and chosen so there are >=2 grid steps when possible (megacore "parallel" axis).
    if tile_b is None:
        tile_b = min(256, max(8, _round_up(pl.cdiv(B, 2), 8)))
    b_pad = _round_up(B, tile_b)
    if b_pad != B:
        x = jnp.pad(x, ((0, b_pad - B), (0, 0)))

    # bf16 MXU operands (accumulation stays f32 inside the kernel).
    x_bf = x.astype(jnp.bfloat16)
    w0_bf = w0.astype(jnp.bfloat16)
    w1_bf = w1.astype(jnp.bfloat16)

    grid = (b_pad // tile_b,)
    full2d = lambda shape: pl.BlockSpec(shape, lambda i: (0, 0))

    # Explicit VMEM budget: double buffer every operand + slack, clamped to v7x's 64 MiB.
    blocks = [
        ((tile_b, emb_dim), jnp.bfloat16),                        # x tile
        ((emb_dim, hid), jnp.bfloat16), ((1, hid), jnp.float32),  # layer 0
        ((hid, hid), jnp.bfloat16), ((1, hid), jnp.float32),      # layer 1
        ((1, hid), jnp.float32), ((1, 1), jnp.float32),           # layer 2
        ((tile_b, 1), jnp.float32),                               # output tile
    ]
    est = sum(2 * _padded_block_bytes(s, d) for s, d in blocks) + (4 << 20)
    vmem_limit = min(max(est, 16 << 20), 64 << 20)

    out = pl.pallas_call(
        discriminator_kernel,
        out_shape=jax.ShapeDtypeStruct((b_pad, 1), jnp.float32),
        grid=grid,
        in_specs=[
            pl.BlockSpec((tile_b, emb_dim), lambda i: (i, 0)),   # x, tiled over batch
            full2d((emb_dim, hid)), full2d((1, hid)),            # layer 0 (grid-invariant)
            full2d((hid, hid)), full2d((1, hid)),                # layer 1 (grid-invariant)
            full2d((1, hid)), full2d((1, 1)),                    # layer 2 (grid-invariant)
        ],
        out_specs=pl.BlockSpec((tile_b, 1), lambda i: (i, 0)),
        compiler_params=pltpu.CompilerParams(
            dimension_semantics=("parallel",),
            vmem_limit_bytes=vmem_limit,
        ),
    )(x_bf, w0_bf, b0, w1_bf, b1, w2, b2)

    return out.reshape(-1)[:B]  # .view(-1) equivalent, padding removed


def init_params(key, emb_dim, hid_dim):
    """Deterministic PyTorch-nn.Linear-style uniform init."""
    def linear(k, fan_in, w_shape, b_shape):
        kw, kb = jax.random.split(k)
        bound = 1.0 / (fan_in ** 0.5)
        w = jax.random.uniform(kw, w_shape, jnp.float32, -bound, bound)
        b = jax.random.uniform(kb, b_shape, jnp.float32, -bound, bound)
        return w, b

    k0, k1, k2 = jax.random.split(key, 3)
    return (
        linear(k0, emb_dim, (emb_dim, hid_dim), (1, hid_dim)),   # (in, out)
        linear(k1, hid_dim, (hid_dim, hid_dim), (1, hid_dim)),   # (in, out)
        linear(k2, hid_dim, (1, hid_dim), (1, 1)),               # PyTorch-native (1, hid) row
    )


def discriminator_ref_f32(x, params):
    """Pure-JAX f32 reference for the same forward pass."""
    (w0, b0), (w1, b1), (w2, b2) = params
    h = _leaky_relu(x @ w0 + b0)
    h = _leaky_relu(h @ w1 + b1)
    logit = h @ w2.T + b2
    return jax.nn.sigmoid(logit).reshape(-1)


def discriminator_ref_bf16(x, params):
    """Reference matching the kernel's numerics (bf16 matmul inputs, f32 accumulation)."""
    (w0, b0), (w1, b1), (w2, b2) = params
    h = jnp.dot(x.astype(jnp.bfloat16), w0.astype(jnp.bfloat16),
                preferred_element_type=jnp.float32)
    h = _leaky_relu(h + b0)
    h = jnp.dot(h.astype(jnp.bfloat16), w1.astype(jnp.bfloat16),
                preferred_element_type=jnp.float32)
    h = _leaky_relu(h + b1)
    logit = jnp.sum(h * w2, axis=-1, keepdims=True) + b2
    return _stable_sigmoid(logit).reshape(-1)


if __name__ == "__main__":
    # Small config consistent with the module; batch deliberately not a tile multiple
    # to exercise the padding path.
    emb_dim, hid_dim, batch = 128, 128, 200

    key = jax.random.PRNGKey(0)
    kx, kp = jax.random.split(key)
    x = jax.random.normal(kx, (batch, emb_dim), dtype=jnp.float32)
    params = init_params(kp, emb_dim, hid_dim)

    out = discriminator_forward(x, params)
    out = jax.block_until_ready(out)
    assert out.shape == (batch,)

    # Check against a reference with matching bf16/f32 numerics (accumulation-order slack).
    ref_same = discriminator_ref_bf16(x, params)
    assert jnp.allclose(out, ref_same, atol=2e-3, rtol=0), "mismatch vs bf16-matched reference"

    # Loose semantic check against the full-f32 PyTorch-equivalent forward.
    ref_f32 = discriminator_ref_f32(x, params)
    assert jnp.allclose(out, ref_f32, atol=5e-2, rtol=0), "mismatch vs f32 reference"

    print("KERNEL_OK")
</pallas_src>

<mosaic_0001>
module attributes {stable_mosaic.version = 11 : i64} {
  func.func @discriminator_kernel(%arg0: i32, %arg1: memref<104x128xbf16, #tpu.memory_space<vmem>>, %arg2: memref<128x128xbf16, #tpu.memory_space<vmem>>, %arg3: memref<1x128xf32, #tpu.memory_space<vmem>>, %arg4: memref<128x128xbf16, #tpu.memory_space<vmem>>, %arg5: memref<1x128xf32, #tpu.memory_space<vmem>>, %arg6: memref<1x128xf32, #tpu.memory_space<vmem>>, %arg7: memref<1x1xf32, #tpu.memory_space<vmem>>, %arg8: memref<104x1xf32, #tpu.memory_space<vmem>>) attributes {dimension_semantics = [#tpu.dimension_semantics<parallel>], iteration_bounds = array<i64: 2>, scalar_prefetch = 0 : i64, scratch_operands = 0 : i64, tpu.core_type = #tpu.core_type<tc>, window_params = [{transform_indices = @transform_0, window_bounds = array<i64: 104, 128>}, {pipeline_mode = #tpu.pipeline_mode<synchronous>, transform_indices = @transform_1, window_bounds = array<i64: 128, 128>}, {pipeline_mode = #tpu.pipeline_mode<synchronous>, transform_indices = @transform_2, window_bounds = array<i64: 1, 128>}, {pipeline_mode = #tpu.pipeline_mode<synchronous>, transform_indices = @transform_3, window_bounds = array<i64: 128, 128>}, {pipeline_mode = #tpu.pipeline_mode<synchronous>, transform_indices = @transform_4, window_bounds = array<i64: 1, 128>}, {pipeline_mode = #tpu.pipeline_mode<synchronous>, transform_indices = @transform_5, window_bounds = array<i64: 1, 128>}, {pipeline_mode = #tpu.pipeline_mode<synchronous>, transform_indices = @transform_6, window_bounds = array<i64: 1, 1>}, {transform_indices = @transform_7, window_bounds = array<i64: 104, 1>}]} {
    %c0 = arith.constant 0 : index
    %c0_0 = arith.constant 0 : index
    %0 = vector.load %arg1[%c0, %c0_0] : memref<104x128xbf16, #tpu.memory_space<vmem>>, vector<104x128xbf16>
    %c0_1 = arith.constant 0 : index
    %c0_2 = arith.constant 0 : index
    %1 = vector.load %arg2[%c0_1, %c0_2] : memref<128x128xbf16, #tpu.memory_space<vmem>>, vector<128x128xbf16>
    %cst = arith.constant dense<0.000000e+00> : vector<104x128xf32>
    %2 = tpu.matmul %0, %1, %cst {dimension_numbers = #tpu.dot_dimension_numbers<[1], [0], [0], [1], [0, 0, 1, 1], [], []>} : vector<104x128xbf16>, vector<128x128xbf16>, vector<104x128xf32> -> vector<104x128xf32>
    %c0_3 = arith.constant 0 : index
    %c0_4 = arith.constant 0 : index
    %3 = vector.load %arg3[%c0_3, %c0_4] : memref<1x128xf32, #tpu.memory_space<vmem>>, vector<1x128xf32>
    %4 = vector.broadcast %3 : vector<1x128xf32> to vector<104x128xf32>
    %5 = arith.addf %2, %4 : vector<104x128xf32>
    %cst_5 = arith.constant 0.000000e+00 : f32
    %6 = vector.broadcast %cst_5 : f32 to vector<104x128xf32>
    %7 = arith.cmpf ogt, %5, %6 : vector<104x128xf32>
    %cst_6 = arith.constant 2.000000e-01 : f32
    %8 = vector.broadcast %cst_6 : f32 to vector<104x128xf32>
    %9 = arith.mulf %8, %5 : vector<104x128xf32>
    %10 = arith.select %7, %5, %9 : vector<104x128xi1>, vector<104x128xf32>
    %11 = arith.truncf %10 : vector<104x128xf32> to vector<104x128xbf16>
    %c0_7 = arith.constant 0 : index
    %c0_8 = arith.constant 0 : index
    %12 = vector.load %arg4[%c0_7, %c0_8] : memref<128x128xbf16, #tpu.memory_space<vmem>>, vector<128x128xbf16>
    %cst_9 = arith.constant dense<0.000000e+00> : vector<104x128xf32>
    %13 = tpu.matmul %11, %12, %cst_9 {dimension_numbers = #tpu.dot_dimension_numbers<[1], [0], [0], [1], [0, 0, 1, 1], [], []>} : vector<104x128xbf16>, vector<128x128xbf16>, vector<104x128xf32> -> vector<104x128xf32>
    %c0_10 = arith.constant 0 : index
    %c0_11 = arith.constant 0 : index
    %14 = vector.load %arg5[%c0_10, %c0_11] : memref<1x128xf32, #tpu.memory_space<vmem>>, vector<1x128xf32>
    %15 = vector.broadcast %14 : vector<1x128xf32> to vector<104x128xf32>
    %16 = arith.addf %13, %15 : vector<104x128xf32>
    %cst_12 = arith.constant 0.000000e+00 : f32
    %17 = vector.broadcast %cst_12 : f32 to vector<104x128xf32>
    %18 = arith.cmpf ogt, %16, %17 : vector<104x128xf32>
    %cst_13 = arith.constant 2.000000e-01 : f32
    %19 = vector.broadcast %cst_13 : f32 to vector<104x128xf32>
    %20 = arith.mulf %19, %16 : vector<104x128xf32>
    %21 = arith.select %18, %16, %20 : vector<104x128xi1>, vector<104x128xf32>
    %c0_14 = arith.constant 0 : index
    %c0_15 = arith.constant 0 : index
    %22 = vector.load %arg6[%c0_14, %c0_15] : memref<1x128xf32, #tpu.memory_space<vmem>>, vector<1x128xf32>
    %23 = vector.broadcast %22 : vector<1x128xf32> to vector<104x128xf32>
    %24 = arith.mulf %21, %23 : vector<104x128xf32>
    %cst_16 = arith.constant dense<0.000000e+00> : vector<104xf32>
    %25 = vector.multi_reduction <add>, %24, %cst_16 [1] : vector<104x128xf32> to vector<104xf32>
    %26 = vector.shape_cast %25 : vector<104xf32> to vector<104x1xf32>
    %c0_17 = arith.constant 0 : index
    %c0_18 = arith.constant 0 : index
    %27 = vector.load %arg7[%c0_17, %c0_18] : memref<1x1xf32, #tpu.memory_space<vmem>>, vector<1x1xf32>
    %28 = vector.broadcast %27 : vector<1x1xf32> to vector<104x1xf32>
    %29 = arith.addf %26, %28 : vector<104x1xf32>
    %30 = math.absf %29 : vector<104x1xf32>
    %cst_19 = arith.constant 0.000000e+00 : f32
    %31 = vector.broadcast %cst_19 : f32 to vector<104x1xf32>
    %32 = arith.subf %31, %30 : vector<104x1xf32>
    %33 = math.exp %32 : vector<104x1xf32>
    %cst_20 = arith.constant 0.000000e+00 : f32
    %34 = vector.broadcast %cst_20 : f32 to vector<104x1xf32>
    %35 = arith.cmpf oge, %29, %34 : vector<104x1xf32>
    %cst_21 = arith.constant 1.000000e+00 : f32
    %36 = vector.broadcast %cst_21 : f32 to vector<104x1xf32>
    %37 = arith.select %35, %36, %33 : vector<104x1xi1>, vector<104x1xf32>
    %cst_22 = arith.constant 1.000000e+00 : f32
    %38 = vector.broadcast %cst_22 : f32 to vector<104x1xf32>
    %39 = arith.addf %38, %33 : vector<104x1xf32>
    %40 = arith.divf %37, %39 : vector<104x1xf32>
    %c0_23 = arith.constant 0 : index
    %c0_24 = arith.constant 0 : index
    %41 = vector.load %arg8[%c0_23, %c0_24] : memref<104x1xf32, #tpu.memory_space<vmem>>, vector<104x1xf32>
    tpu.vector_store %arg8[%c0_23, %c0_24], %40 {strides = array<i32>} : memref<104x1xf32, #tpu.memory_space<vmem>>, vector<104x1xf32>,
    return
  }
  func.func @transform_0(%arg0: i32) -> (i32, i32) {
    %c0_i32 = arith.constant 0 : i32
    %c0_i32_0 = arith.constant 0 : i32
    return %arg0, %c0_i32 : i32, i32
  }
  func.func @transform_1(%arg0: i32) -> (i32, i32) {
    %c0_i32 = arith.constant 0 : i32
    %c0_i32_0 = arith.constant 0 : i32
    %c0_i32_1 = arith.constant 0 : i32
    return %c0_i32, %c0_i32_0 : i32, i32
  }
  func.func @transform_2(%arg0: i32) -> (i32, i32) {
    %c0_i32 = arith.constant 0 : i32
    %c0_i32_0 = arith.constant 0 : i32
    %c0_i32_1 = arith.constant 0 : i32
    return %c0_i32, %c0_i32_0 : i32, i32
  }
  func.func @transform_3(%arg0: i32) -> (i32, i32) {
    %c0_i32 = arith.constant 0 : i32
    %c0_i32_0 = arith.constant 0 : i32
    %c0_i32_1 = arith.constant 0 : i32
    return %c0_i32, %c0_i32_0 : i32, i32
  }
  func.func @transform_4(%arg0: i32) -> (i32, i32) {
    %c0_i32 = arith.constant 0 : i32
    %c0_i32_0 = arith.constant 0 : i32
    %c0_i32_1 = arith.constant 0 : i32
    return %c0_i32, %c0_i32_0 : i32, i32
  }
  func.func @transform_5(%arg0: i32) -> (i32, i32) {
    %c0_i32 = arith.constant 0 : i32
    %c0_i32_0 = arith.constant 0 : i32
    %c0_i32_1 = arith.constant 0 : i32
    return %c0_i32, %c0_i32_0 : i32, i32
  }
  func.func @transform_6(%arg0: i32) -> (i32, i32) {
    %c0_i32 = arith.constant 0 : i32
    %c0_i32_0 = arith.constant 0 : i32
    %c0_i32_1 = arith.constant 0 : i32
    return %c0_i32, %c0_i32_0 : i32, i32
  }
  func.func @transform_7(%arg0: i32) -> (i32, i32) {
    %c0_i32 = arith.constant 0 : i32
    %c0_i32_0 = arith.constant 0 : i32
    return %arg0, %c0_i32 : i32, i32
  }
}

</mosaic_0001>

<llo_original>
// kernel: tpu_custom_call.1
$region0: #{tpu_custom_call.1}
  #allocation0 [shape = 'u32[]', space=smem, size = 0x4, offset = 0x4, fixed_abs, tag = 'smem constant byte address 0x4 - core index']
  #allocation1 [shape = 'u32[144,128]{1,0:T(1,128)}', space=vmem, size = 0x12000, scoped, tag = 'internal scratch']
  #allocation2 [shape = 'f32[1,1]{1,0:T(1,128)S(1)}', space=vmem, size = 0x200, scoped, tag = 'scoped memory for tpu_custom_call.1']
  %s0 = inlined_call_operand.hbm [shape: bf16[208,128], index: 0, kind: input, shape index: {}]
  %s1 = inlined_call_operand.hbm [shape: bf16[128,128], index: 1, kind: input, shape index: {}]
  %s2 = inlined_call_operand.vmem [shape: f32[1,128], index: 2, kind: input, shape index: {}]
  %s3 = inlined_call_operand.hbm [shape: bf16[128,128], index: 3, kind: input, shape index: {}]
  %s4 = inlined_call_operand.vmem [shape: f32[1,128], index: 4, kind: input, shape index: {}]
  %s5 = inlined_call_operand.vmem [shape: f32[1,128], index: 5, kind: input, shape index: {}]
  %s6 = inlined_call_operand.<no memory space> [shape: f32[1,1], index: 6, kind: input, shape index: {}]
  %s7 = inlined_call_operand.vmem [shape: f32[208,1], index: 7, kind: output, shape index: {}]
  %s8 = sld [smem:[#allocation0]]
  $region73: #{tpu_custom_call.1} parent=0
    _
  %s10 = ssub.s32 1, %s8
  %s11 = scalar_select 0, %s10, %s8
  %v12 = vstv %s6
  %13 = vst [vmem:[#allocation2] sm:$0x1] %v12
  $region1: #{tpu_custom_call.1} parent=0
    #allocation3 [shape = 'u8[53248]{0}', space=vmem, size = 0xd000, scoped, tag = 'input window, operand 0']
    #allocation4 [shape = 's32[2]{0}', space=sflag, size = 0x8, scoped, tag = 'scoped memory for tpu_custom_call.1']
    #allocation5 [shape = 'u8[32768]{0}', space=vmem, size = 0x8000, scoped, tag = 'input window, operand 1, single buffered']
    #allocation6 [shape = 's32[1]{0}', space=sflag, size = 0x4, scoped, tag = 'scoped memory for tpu_custom_call.1']
    #allocation7 [shape = 'u8[32768]{0}', space=vmem, size = 0x8000, scoped, tag = 'input window, operand 3, single buffered']
    %14 = vsyncpa [#allocation4], 0
    %s15 = scalar_lea.sflag [#allocation4], 1
    %16 = vsyncpa %s15, 0
    %17 = vsyncpa [#allocation6], 0
    loop: start=0, step=1, limit=4
    $region2: #{tpu_custom_call.1} parent=1 // loop_pre_header
      _
    $region3: #{tpu_custom_call.1} parent=1 // loop_header
      %s19 = sphi 0, %s23
      %p20 = scmp.ge.s32.totalorder %s19, 4
      %s29 = sphi 0, %s31
      %s32 = sphi 0, %s29
      %s33 = sphi 0, %s32
      %s49 = sphi 0, %s33
      %s53 = sphi 0, %s53
      %s55 = sphi 0, %s53
      %s56 = sphi 0, %s55
      %s70 = sphi 0, %s56
      %s74 = sphi 0, %s74
      %s76 = sphi 0, %s74
      %s77 = sphi 0, %s76
      %s91 = sphi 0, %s77
      %s95 = sphi 0, %s95
      %s97 = sphi 0, %s95
      %s98 = sphi 0, %s97
      %s112 = sphi 0, %s98
      %s116 = sphi 0, %s116
      %s118 = sphi 0, %s116
      %s119 = sphi 0, %s118
      %s133 = sphi 0, %s119
      %s137 = sphi 0, %s137
      %s139 = sphi 0, %s137
      %s140 = sphi 0, %s139
      %s154 = sphi 0, %s140
      %s158 = sphi 0, %s158
      %s160 = sphi 0, %s158
      %s161 = sphi 0, %s160
      %s175 = sphi 0, %s161
      %s181 = sphi 0, %s183
      %s184 = sphi 0, %s181
      %s185 = sphi 0, %s184
      %s201 = sphi 0, %s185
    $region4: #{tpu_custom_call.1} parent=1 // loop_header_branch
      %22 = sbr.rel (%p20) target = $region8
    $region5: #{tpu_custom_call.1} parent=1 // loop_body
      %s24 = ssub.s32 %s19, 1
      %s25 = ssub.s32 %s19, 2
      %s26 = sadd.s32 %s19, 1
      %s27 = ssub.s32 %s19, %s26
      %p28 = scmp.eq.s32.totalorder %s27, 0
      %s30 = sadd.s32 %s29, 1
      %s31 = scalar_select %p28, %s29, %s30
      %p34 = pneg %p28
      %p35 = scmp.eq.s32.totalorder %s19, 1
      %p36 = por %p34, %p35
      %p37 = scmp.ne.s32.totalorder %s29, %s32
      %p38 = scmp.eq.s32.totalorder %s19, 0
      %p39 = por %p37, %p38
      %p40 = scmp.ne.s32.totalorder %s29, %s32
      %p41 = scmp.eq.s32.totalorder %s24, 1
      %p42 = por %p40, %p41
      %p43 = scmp.ne.s32.totalorder %s32, %s33
      %p44 = scmp.eq.s32.totalorder %s24, 0
      %p45 = por %p43, %p44
      %p46 = scmp.ne.s32.totalorder %s32, %s33
      %p47 = scmp.eq.s32.totalorder %s25, 1
      %p48 = por %p46, %p47
      %p50 = scmp.ne.s32.totalorder %s33, %s49
      %p51 = scmp.eq.s32.totalorder %s25, 0
      %p52 = por %p50, %p51
      %s54 = sadd.s32 %s53, 1
      %p57 = scmp.eq.s32.totalorder %s19, 1
      %p58 = scmp.ne.s32.totalorder %s53, %s55
      %p59 = scmp.eq.s32.totalorder %s19, 0
      %p60 = por %p58, %p59
      %p61 = scmp.ne.s32.totalorder %s53, %s55
      %p62 = scmp.eq.s32.totalorder %s24, 1
      %p63 = por %p61, %p62
      %p64 = scmp.ne.s32.totalorder %s55, %s56
      %p65 = scmp.eq.s32.totalorder %s24, 0
      %p66 = por %p64, %p65
      %p67 = scmp.ne.s32.totalorder %s55, %s56
      %p68 = scmp.eq.s32.totalorder %s25, 1
      %p69 = por %p67, %p68
      %p71 = scmp.ne.s32.totalorder %s56, %s70
      %p72 = scmp.eq.s32.totalorder %s25, 0
      %p73 = por %p71, %p72
      %s75 = sadd.s32 %s74, 1
      %p78 = scmp.eq.s32.totalorder %s19, 1
      %p79 = scmp.ne.s32.totalorder %s74, %s76
      %p80 = scmp.eq.s32.totalorder %s19, 0
      %p81 = por %p79, %p80
      %p82 = scmp.ne.s32.totalorder %s74, %s76
      %p83 = scmp.eq.s32.totalorder %s24, 1
      %p84 = por %p82, %p83
      %p85 = scmp.ne.s32.totalorder %s76, %s77
      %p86 = scmp.eq.s32.totalorder %s24, 0
      %p87 = por %p85, %p86
      %p88 = scmp.ne.s32.totalorder %s76, %s77
      %p89 = scmp.eq.s32.totalorder %s25, 1
      %p90 = por %p88, %p89
      %p92 = scmp.ne.s32.totalorder %s77, %s91
      %p93 = scmp.eq.s32.totalorder %s25, 0
      %p94 = por %p92, %p93
      %s96 = sadd.s32 %s95, 1
      %p99 = scmp.eq.s32.totalorder %s19, 1
      %p100 = scmp.ne.s32.totalorder %s95, %s97
      %p101 = scmp.eq.s32.totalorder %s19, 0
      %p102 = por %p100, %p101
      %p103 = scmp.ne.s32.totalorder %s95, %s97
      %p104 = scmp.eq.s32.totalorder %s24, 1
      %p105 = por %p103, %p104
      %p106 = scmp.ne.s32.totalorder %s97, %s98
      %p107 = scmp.eq.s32.totalorder %s24, 0
      %p108 = por %p106, %p107
      %p109 = scmp.ne.s32.totalorder %s97, %s98
      %p110 = scmp.eq.s32.totalorder %s25, 1
      %p111 = por %p109, %p110
      %p113 = scmp.ne.s32.totalorder %s98, %s112
      %p114 = scmp.eq.s32.totalorder %s25, 0
      %p115 = por %p113, %p114
      %s117 = sadd.s32 %s116, 1
      %p120 = scmp.eq.s32.totalorder %s19, 1
      %p121 = scmp.ne.s32.totalorder %s116, %s118
      %p122 = scmp.eq.s32.totalorder %s19, 0
      %p123 = por %p121, %p122
      %p124 = scmp.ne.s32.totalorder %s116, %s118
      %p125 = scmp.eq.s32.totalorder %s24, 1
      %p126 = por %p124, %p125
      %p127 = scmp.ne.s32.totalorder %s118, %s119
      %p128 = scmp.eq.s32.totalorder %s24, 0
      %p129 = por %p127, %p128
      %p130 = scmp.ne.s32.totalorder %s118, %s119
      %p131 = scmp.eq.s32.totalorder %s25, 1
      %p132 = por %p130, %p131
      %p134 = scmp.ne.s32.totalorder %s119, %s133
      %p135 = scmp.eq.s32.totalorder %s25, 0
      %p136 = por %p134, %p135
      %s138 = sadd.s32 %s137, 1
      %p141 = scmp.eq.s32.totalorder %s19, 1
      %p142 = scmp.ne.s32.totalorder %s137, %s139
      %p143 = scmp.eq.s32.totalorder %s19, 0
      %p144 = por %p142, %p143
      %p145 = scmp.ne.s32.totalorder %s137, %s139
      %p146 = scmp.eq.s32.totalorder %s24, 1
      %p147 = por %p145, %p146
      %p148 = scmp.ne.s32.totalorder %s139, %s140
      %p149 = scmp.eq.s32.totalorder %s24, 0
      %p150 = por %p148, %p149
      %p151 = scmp.ne.s32.totalorder %s139, %s140
      %p152 = scmp.eq.s32.totalorder %s25, 1
      %p153 = por %p151, %p152
      %p155 = scmp.ne.s32.totalorder %s140, %s154
      %p156 = scmp.eq.s32.totalorder %s25, 0
      %p157 = por %p155, %p156
      %s159 = sadd.s32 %s158, 1
      %p162 = scmp.eq.s32.totalorder %s19, 1
      %p163 = scmp.ne.s32.totalorder %s158, %s160
      %p164 = scmp.eq.s32.totalorder %s19, 0
      %p165 = por %p163, %p164
      %p166 = scmp.ne.s32.totalorder %s158, %s160
      %p167 = scmp.eq.s32.totalorder %s24, 1
      %p168 = por %p166, %p167
      %p169 = scmp.ne.s32.totalorder %s160, %s161
      %p170 = scmp.eq.s32.totalorder %s24, 0
      %p171 = por %p169, %p170
      %p172 = scmp.ne.s32.totalorder %s160, %s161
      %p173 = scmp.eq.s32.totalorder %s25, 1
      %p174 = por %p172, %p173
      %p176 = scmp.ne.s32.totalorder %s161, %s175
      %p177 = scmp.eq.s32.totalorder %s25, 0
      %p178 = por %p176, %p177
      %s179 = ssub.s32 %s19, %s26
      %p180 = scmp.eq.s32.totalorder %s179, 0
      %s182 = sadd.s32 %s181, 1
      %s183 = scalar_select %p180, %s181, %s182
      %p186 = pneg %p180
      %p187 = scmp.eq.s32.totalorder %s19, 1
      %p188 = por %p186, %p187
      %p189 = scmp.ne.s32.totalorder %s181, %s184
      %p190 = scmp.eq.s32.totalorder %s19, 0
      %p191 = por %p189, %p190
      %p192 = scmp.ne.s32.totalorder %s181, %s184
      %p193 = scmp.eq.s32.totalorder %s24, 1
      %p194 = por %p192, %p193
      %p195 = scmp.ne.s32.totalorder %s184, %s185
      %p196 = scmp.eq.s32.totalorder %s24, 0
      %p197 = por %p195, %p196
      %p198 = scmp.ne.s32.totalorder %s184, %s185
      %p199 = scmp.eq.s32.totalorder %s25, 1
      %p200 = por %p198, %p199
      %p202 = scmp.ne.s32.totalorder %s185, %s201
      %p203 = scmp.eq.s32.totalorder %s25, 0
      %p204 = por %p202, %p203
      %p205 = scmp.le.s32.totalorder 1, %s19
      %p206 = scmp.lt.s32.totalorder %s19, 3
      %p207 = pnand %p205, %p206
      %p208 = pneg %p207
      // Predicated region
      $region9: #{tpu_custom_call.1} parent=5 // pred_check
        _
      $region10: #{tpu_custom_call.1} parent=5 // pred_check_branch
        %210 = sbr.rel (%p207) target = $region12
      $region11: #{tpu_custom_call.1} parent=5 // pred_region
        %s211 = ssub.s32 %s19, 1
        // Predicated region
        $region13: #{tpu_custom_call.1} parent=11 // pred_check
          %p212 = pneg %p66
        $region14: #{tpu_custom_call.1} parent=11 // pred_check_branch
          %214 = sbr.rel (%p212) target = $region16
        $region15: #{tpu_custom_call.1} parent=11 // pred_region
          %s216 = ssub.s32 1024, 1024
          %217 = vsyncadd [#allocation6], %s216
          %s218 = sshll.u32 [#allocation5], 4
          %s219 = int_to_ptr.vmem [resolvable:$true] %s218
          %224 = dma.hbm_to_vmem [thread:$0]  %s1, 1024, %s219, [#allocation6], 64, 64, 4
        $region16: #{tpu_custom_call.1} parent=11 // pred_fallthru
          _
        // Predicated region
        $region17: #{tpu_custom_call.1} parent=11 // pred_check
          %p225 = pneg %p87
        $region18: #{tpu_custom_call.1} parent=11 // pred_check_branch
          %227 = sbr.rel (%p225) target = $region20
        $region19: #{tpu_custom_call.1} parent=11 // pred_region
          _
        $region20: #{tpu_custom_call.1} parent=11 // pred_fallthru
          _
        // Predicated region
        $region21: #{tpu_custom_call.1} parent=11 // pred_check
          %p228 = pneg %p108
        $region22: #{tpu_custom_call.1} parent=11 // pred_check_branch
          %230 = sbr.rel (%p228) target = $region24
        $region23: #{tpu_custom_call.1} parent=11 // pred_region
          %s232 = ssub.s32 1024, 1024
          %233 = vsyncadd [#allocation6], %s232
          %s234 = sshll.u32 [#allocation7], 4
          %s235 = int_to_ptr.vmem [resolvable:$true] %s234
          %240 = dma.hbm_to_vmem [thread:$0]  %s3, 1024, %s235, [#allocation6], 64, 64, 4
        $region24: #{tpu_custom_call.1} parent=11 // pred_fallthru
          _
        // Predicated region
        $region25: #{tpu_custom_call.1} parent=11 // pred_check
          %p241 = pneg %p129
        $region26: #{tpu_custom_call.1} parent=11 // pred_check_branch
          %243 = sbr.rel (%p241) target = $region28
        $region27: #{tpu_custom_call.1} parent=11 // pred_region
          _
        $region28: #{tpu_custom_call.1} parent=11 // pred_fallthru
          _
        // Predicated region
        $region29: #{tpu_custom_call.1} parent=11 // pred_check
          %p244 = pneg %p150
        $region30: #{tpu_custom_call.1} parent=11 // pred_check_branch
          %246 = sbr.rel (%p244) target = $region32
        $region31: #{tpu_custom_call.1} parent=11 // pred_region
          _
        $region32: #{tpu_custom_call.1} parent=11 // pred_fallthru
          _
        // Predicated region
        $region33: #{tpu_custom_call.1} parent=11 // pred_check
          %p247 = pneg %p171
        $region34: #{tpu_custom_call.1} parent=11 // pred_check_branch
          %249 = sbr.rel (%p247) target = $region36
        $region35: #{tpu_custom_call.1} parent=11 // pred_region
          _
        $region36: #{tpu_custom_call.1} parent=11 // pred_fallthru
          _
      $region12: #{tpu_custom_call.1} parent=5 // pred_fallthru
        _
      %p250 = scmp.lt.s32.totalorder %s19, 2
      // Predicated region
      $region37: #{tpu_custom_call.1} parent=5 // pred_check
        %p251 = pneg %p250
      $region38: #{tpu_custom_call.1} parent=5 // pred_check_branch
        %253 = sbr.rel (%p251) target = $region40
      $region39: #{tpu_custom_call.1} parent=5 // pred_region
        // Predicated region
        $region41: #{tpu_custom_call.1} parent=39 // pred_check
          %p254 = pneg %p39
        $region42: #{tpu_custom_call.1} parent=39 // pred_check_branch
          %256 = sbr.rel (%p254) target = $region44
        $region43: #{tpu_custom_call.1} parent=39 // pred_region
          %s257 = sand.u32 %s29, 1
          %s258 = scalar_lea.sflag [#allocation4], %s257
          %s259 = sand.u32 %s29, 1
          %s260 = smul.addr %s259, 52
          %s261 = scalar_lea.vmem [#allocation3], %s260
          %s262 = smul.u32 13, %s19
          %s264 = ssub.s32 832, 832
          %265 = vsyncadd %s258, %s264
          %s266 = smul.addr %s262, 64
          %s267 = scalar_lea.hbm %s0, %s266
          %s268 = sshll.u32 %s261, 4
          %s269 = int_to_ptr.vmem [resolvable:$true] %s268
          %274 = dma.hbm_to_vmem [thread:$0]  %s267, 832, %s269, %s258, 64, 64, 4
        $region44: #{tpu_custom_call.1} parent=39 // pred_fallthru
          _
      $region40: #{tpu_custom_call.1} parent=5 // pred_fallthru
        _
      %p275 = scmp.le.s32.totalorder 1, %s19
      %p276 = scmp.lt.s32.totalorder %s19, 3
      %p277 = pnand %p275, %p276
      %p278 = pneg %p277
      // Predicated region
      $region45: #{tpu_custom_call.1} parent=5 // pred_check
        _
      $region46: #{tpu_custom_call.1} parent=5 // pred_check_branch
        %280 = sbr.rel (%p277) target = $region48
      $region47: #{tpu_custom_call.1} parent=5 // pred_region
        %s281 = ssub.s32 %s19, 1
        %s282 = sand.u32 %s32, 1
        %s283 = scalar_lea.sflag [#allocation4], %s282
        %s284 = sand.u32 %s32, 1
        %s285 = smul.addr %s284, 52
        %s286 = scalar_lea.vmem [#allocation3], %s285
        // Predicated region
        $region49: #{tpu_custom_call.1} parent=47 // pred_check
          %p287 = pneg %p45
        $region50: #{tpu_custom_call.1} parent=47 // pred_check_branch
          %289 = sbr.rel (%p287) target = $region52
        $region51: #{tpu_custom_call.1} parent=47 // pred_region
          %290 = dma.done %s283, 832
        $region52: #{tpu_custom_call.1} parent=47 // pred_fallthru
          _
        // Predicated region
        $region53: #{tpu_custom_call.1} parent=47 // pred_check
          %p291 = pneg %p66
        $region54: #{tpu_custom_call.1} parent=47 // pred_check_branch
          %293 = sbr.rel (%p291) target = $region56
        $region55: #{tpu_custom_call.1} parent=47 // pred_region
          %294 = dma.done [#allocation6], 1024
        $region56: #{tpu_custom_call.1} parent=47 // pred_fallthru
          _
        // Predicated region
        $region57: #{tpu_custom_call.1} parent=47 // pred_check
          %p295 = pneg %p108
        $region58: #{tpu_custom_call.1} parent=47 // pred_check_branch
          %297 = sbr.rel (%p295) target = $region60
        $region59: #{tpu_custom_call.1} parent=47 // pred_region
          %298 = dma.done [#allocation6], 1024
        $region60: #{tpu_custom_call.1} parent=47 // pred_fallthru
          _
        %s299 = sand.u32 %s32, 1
        %s300 = scalar_lea.sflag [#allocation4], %s299
        %s301 = sand.u32 %s32, 1
        %s302 = smul.addr %s301, 52
        %s303 = scalar_lea.vmem [#allocation3], %s302
        %p304 = pneg %p45
        %p305 = pneg %p42
        %p306 = pneg %p66
        %p307 = pneg %p63
        %p308 = pneg %p87
        %p309 = pneg %p84
        %p310 = pneg %p108
        %p311 = pneg %p105
        %p312 = pneg %p129
        %p313 = pneg %p126
        %p314 = pneg %p150
        %p315 = pneg %p147
        %p316 = pneg %p171
        %p317 = pneg %p168
        %p318 = pneg %p197
        %p319 = pneg %p194
        %s320 = smul.u32 13, %s24
        %p321 = scmp.lt.s32.totalorder %s320, 25
        %s322 = scalar_select %p321, %s320, 25
        %s323 = smul.addr %s322, 8
        %s324 = scalar_lea.vmem %s7, %s323
        %s325 = smul.u32 13, %s24
        %s326 = smul.u32 13, %s24
        %p327 = scmp.lt.s32.totalorder %s326, 25
        %s328 = scalar_select %p327, %s326, 25
        %s329 = smul.addr %s328, 8
        %s330 = scalar_lea.vmem %s7, %s329
        %s331 = smul.u32 13, %s24
        %v333 = vld [vmem:[%s286] sm:$0xf]
        %v334 = vld [vmem:[%s286 + $0x4] sm:$0xf]
        %v335 = vld [vmem:[%s286 + $0x8] sm:$0xf]
        %v336 = vld [vmem:[%s286 + $0xc] sm:$0xf]
        %v337 = vld [vmem:[%s286 + $0x10] sm:$0xf]
        %v338 = vld [vmem:[%s286 + $0x14] sm:$0xf]
        %v339 = vld [vmem:[%s286 + $0x18] sm:$0xf]
        %v340 = vld [vmem:[%s286 + $0x1c] sm:$0xf]
        %v341 = vld [vmem:[%s286 + $0x20] sm:$0xf]
        %v342 = vld [vmem:[%s286 + $0x24] sm:$0xf]
        %v343 = vld [vmem:[%s286 + $0x28] sm:$0xf]
        %v344 = vld [vmem:[%s286 + $0x2c] sm:$0xf]
        %v345 = vld [vmem:[%s286 + $0x30] sm:$0xf]
        %v346 = vld [vmem:[#allocation5] sm:$0xf]
        %v347 = vld [vmem:[#allocation5 + $0x4] sm:$0xf]
        %v348 = vld [vmem:[#allocation5 + $0x8] sm:$0xf]
        %v349 = vld [vmem:[#allocation5 + $0xc] sm:$0xf]
        %v350 = vld [vmem:[#allocation5 + $0x10] sm:$0xf]
        %v351 = vld [vmem:[#allocation5 + $0x14] sm:$0xf]
        %v352 = vld [vmem:[#allocation5 + $0x18] sm:$0xf]
        %v353 = vld [vmem:[#allocation5 + $0x1c] sm:$0xf]
        %v354 = vld [vmem:[#allocation5 + $0x20] sm:$0xf]
        %v355 = vld [vmem:[#allocation5 + $0x24] sm:$0xf]
        %v356 = vld [vmem:[#allocation5 + $0x28] sm:$0xf]
        %v357 = vld [vmem:[#allocation5 + $0x2c] sm:$0xf]
        %v358 = vld [vmem:[#allocation5 + $0x30] sm:$0xf]
        %v359 = vld [vmem:[#allocation5 + $0x34] sm:$0xf]
        %v360 = vld [vmem:[#allocation5 + $0x38] sm:$0xf]
        %v361 = vld [vmem:[#allocation5 + $0x3c] sm:$0xf]
        %v362 = vld [vmem:[%s2] sm:$0x1]
        %v364 = vlaneseq
        %v365 = vshrl.u32 %v364, 7
        %v366 = vsub.s32 0, %v365
        %v367 = vrot.slane %v362, %v366
        %v382 = vunpack.c.l.b16 %v333
        %v383 = vunpack.c.l.b16 %v334
        %v384 = vunpack.c.l.b16 %v335
        %v385 = vunpack.c.l.b16 %v336
        %v386 = vunpack.c.l.b16 %v337
        %v387 = vunpack.c.l.b16 %v338
        %v388 = vunpack.c.l.b16 %v339
        %v389 = vunpack.c.l.b16 %v340
        %v390 = vunpack.c.l.b16 %v341
        %v391 = vunpack.c.l.b16 %v342
        %v392 = vunpack.c.l.b16 %v343
        %v393 = vunpack.c.l.b16 %v344
        %v394 = vunpack.c.l.b16 %v345
        %v395 = vpack.c.b16 %v383, %v382
        %v396 = vpack.c.b16 %v385, %v384
        %v397 = vpack.c.b16 %v387, %v386
        %v398 = vpack.c.b16 %v389, %v388
        %v399 = vpack.c.b16 %v391, %v390
        %v400 = vpack.c.b16 %v393, %v392
        %v401 = vpack.c.b16 %v394, %v394
        %v425 = vunpack.c.l.b16 %v346
        %v426 = vunpack.c.l.b16 %v347
        %v427 = vunpack.c.l.b16 %v348
        %v428 = vunpack.c.l.b16 %v349
        %v429 = vunpack.c.l.b16 %v350
        %v430 = vunpack.c.l.b16 %v351
        %v431 = vunpack.c.l.b16 %v352
        %v432 = vunpack.c.l.b16 %v353
        %v433 = vunpack.c.l.b16 %v354
        %v434 = vunpack.c.l.b16 %v355
        %v435 = vunpack.c.l.b16 %v356
        %v436 = vunpack.c.l.b16 %v357
        %v437 = vunpack.c.l.b16 %v358
        %v438 = vunpack.c.l.b16 %v359
        %v439 = vunpack.c.l.b16 %v360
        %v440 = vunpack.c.l.b16 %v361
        %v441 = vpack.c.b16 %v426, %v425
        %v442 = vpack.c.b16 %v428, %v427
        %v443 = vpack.c.b16 %v430, %v429
        %v444 = vpack.c.b16 %v432, %v431
        %v445 = vpack.c.b16 %v434, %v433
        %v446 = vpack.c.b16 %v436, %v435
        %v447 = vpack.c.b16 %v438, %v437
        %v448 = vpack.c.b16 %v440, %v439
        %457 = vmatprep.subr.bf16.mxu0 0
        %458 = vmatpush1.bf16.msra.mxu0 %v441
        %459 = vmatprep.subr.bf16.mxu0 0
        %460 = vmatpush1.bf16.msra.mxu0 %v442
        %461 = vmatprep.subr.bf16.mxu0 0
        %462 = vmatpush1.bf16.msra.mxu0 %v443
        %463 = vmatprep.subr.bf16.mxu0 0
        %464 = vmatpush1.bf16.msra.mxu0 %v444
        %465 = vmatprep.subr.bf16.mxu0 0
        %466 = vmatpush1.bf16.msra.mxu0 %v445
        %467 = vmatprep.subr.bf16.mxu0 0
        %468 = vmatpush1.bf16.msra.mxu0 %v446
        %469 = vmatprep.subr.bf16.mxu0 0
        %470 = vmatpush1.bf16.msra.mxu0 %v447
        %471 = vmatprep.subr.bf16.mxu0 0
        %472 = vmatpush1.bf16.msra.mxu0 %v448
        %473 = vmatprep.subr.bf16.mxu0 0
        %474 = vmatpush1.bf16.msra.mxu0 0
        %475 = vmatprep.subr.bf16.mxu0 0
        %476 = vmatpush1.bf16.msra.mxu0 0
        %477 = vmatprep.subr.bf16.mxu0 0
        %478 = vmatpush1.bf16.msra.mxu0 0
        %479 = vmatprep.subr.bf16.mxu0 0
        %480 = vmatpush1.bf16.msra.mxu0 0
        %481 = vmatprep.subr.bf16.mxu0 0
        %482 = vmatpush1.bf16.msra.mxu0 0
        %483 = vmatprep.subr.bf16.mxu0 0
        %484 = vmatpush1.bf16.msra.mxu0 0
        %485 = vmatprep.subr.bf16.mxu0 0
        %486 = vmatpush1.bf16.msra.mxu0 0
        %487 = vmatprep.subr.bf16.mxu0 0
        %488 = vmatpush1.bf16.msra.mxu0 0
        %489 = vmatprep.mubr.bf16.mxu0 0
        %490 = vmatmul.mubr.bf16.gmra.mrb[0].mxu0 %v395
        %v491 = vpop.f32.mrb[0].mxu0
        %v492 = vadd.f32 %v367, %v491
        %v493 = vpop.f32.mrb[0].mxu0
        %v494 = vpop.f32.mrb[0].mxu0
        %v495 = vadd.f32 %v367, %v494
        %v496 = vpop.f32.mrb[0].mxu0
        %497 = vmatprep.mubr.bf16.mxu0 0
        %498 = vmatmul.mubr.bf16.gmra.mrb[0].mxu0 %v396
        %v499 = vpop.f32.mrb[0].mxu0
        %v500 = vadd.f32 %v367, %v499
        %v501 = vpop.f32.mrb[0].mxu0
        %v502 = vpop.f32.mrb[0].mxu0
        %v503 = vadd.f32 %v367, %v502
        %v504 = vpop.f32.mrb[0].mxu0
        %505 = vmatprep.mubr.bf16.mxu0 0
        %506 = vmatmul.mubr.bf16.gmra.mrb[0].mxu0 %v397
        %v507 = vpop.f32.mrb[0].mxu0
        %v508 = vadd.f32 %v367, %v507
        %v509 = vpop.f32.mrb[0].mxu0
        %v510 = vpop.f32.mrb[0].mxu0
        %v511 = vadd.f32 %v367, %v510
        %v512 = vpop.f32.mrb[0].mxu0
        %513 = vmatprep.mubr.bf16.mxu0 0
        %514 = vmatmul.mubr.bf16.gmra.mrb[0].mxu0 %v398
        %v515 = vpop.f32.mrb[0].mxu0
        %v516 = vadd.f32 %v367, %v515
        %v517 = vpop.f32.mrb[0].mxu0
        %v518 = vpop.f32.mrb[0].mxu0
        %v519 = vadd.f32 %v367, %v518
        %v520 = vpop.f32.mrb[0].mxu0
        %521 = vmatprep.mubr.bf16.mxu0 0
        %522 = vmatmul.mubr.bf16.gmra.mrb[0].mxu0 %v399
        %v523 = vpop.f32.mrb[0].mxu0
        %v524 = vadd.f32 %v367, %v523
        %v525 = vpop.f32.mrb[0].mxu0
        %v526 = vpop.f32.mrb[0].mxu0
        %v527 = vadd.f32 %v367, %v526
        %v528 = vpop.f32.mrb[0].mxu0
        %529 = vmatprep.mubr.bf16.mxu0 0
        %530 = vmatmul.mubr.bf16.gmra.mrb[0].mxu0 %v400
        %v531 = vpop.f32.mrb[0].mxu0
        %v532 = vadd.f32 %v367, %v531
        %v533 = vpop.f32.mrb[0].mxu0
        %v534 = vpop.f32.mrb[0].mxu0
        %v535 = vadd.f32 %v367, %v534
        %v536 = vpop.f32.mrb[0].mxu0
        %537 = vmatprep.mubr.bf16.mxu0 0
        %538 = vmatmul.mubr.bf16.gmra.mrb[0].mxu0 %v401
        %v539 = vpop.f32.mrb[0].mxu0
        %v540 = vadd.f32 %v367, %v539
        %v541 = vpop.f32.mrb[0].mxu0
        %v542 = vpop.f32.mrb[0].mxu0
        %v543 = vpop.f32.mrb[0].mxu0
        %544 = vdwg.mxu0
        %vm545 = vcmp.gt.f32.partialorder %v492, 0.0
        %vm546 = vcmp.gt.f32.partialorder %v495, 0.0
        %vm547 = vcmp.gt.f32.partialorder %v500, 0.0
        %vm548 = vcmp.gt.f32.partialorder %v503, 0.0
        %vm549 = vcmp.gt.f32.partialorder %v508, 0.0
        %vm550 = vcmp.gt.f32.partialorder %v511, 0.0
        %vm551 = vcmp.gt.f32.partialorder %v516, 0.0
        %vm552 = vcmp.gt.f32.partialorder %v519, 0.0
        %vm553 = vcmp.gt.f32.partialorder %v524, 0.0
        %vm554 = vcmp.gt.f32.partialorder %v527, 0.0
        %vm555 = vcmp.gt.f32.partialorder %v532, 0.0
        %vm556 = vcmp.gt.f32.partialorder %v535, 0.0
        %vm557 = vcmp.gt.f32.partialorder %v540, 0.0
        %v558 = vmul.f32 %v492, 0.2
        %v559 = vmul.f32 %v495, 0.2
        %v560 = vmul.f32 %v500, 0.2
        %v561 = vmul.f32 %v503, 0.2
        %v562 = vmul.f32 %v508, 0.2
        %v563 = vmul.f32 %v511, 0.2
        %v564 = vmul.f32 %v516, 0.2
        %v565 = vmul.f32 %v519, 0.2
        %v566 = vmul.f32 %v524, 0.2
        %v567 = vmul.f32 %v527, 0.2
        %v568 = vmul.f32 %v532, 0.2
        %v569 = vmul.f32 %v535, 0.2
        %v570 = vmul.f32 %v540, 0.2
        %v571 = vsel %vm545, %v492, %v558
        %v572 = vsel %vm546, %v495, %v559
        %v573 = vsel %vm547, %v500, %v560
        %v574 = vsel %vm548, %v503, %v561
        %v575 = vsel %vm549, %v508, %v562
        %v576 = vsel %vm550, %v511, %v563
        %v577 = vsel %vm551, %v516, %v564
        %v578 = vsel %vm552, %v519, %v565
        %v579 = vsel %vm553, %v524, %v566
        %v580 = vsel %vm554, %v527, %v567
        %v581 = vsel %vm555, %v532, %v568
        %v582 = vsel %vm556, %v535, %v569
        %v583 = vsel %vm557, %v540, %v570
        %v584 = vpack.c.bf16 %v572, %v571
        %v585 = vpack.c.bf16 %v574, %v573
        %v586 = vpack.c.bf16 %v576, %v575
        %v587 = vpack.c.bf16 %v578, %v577
        %v588 = vpack.c.bf16 %v580, %v579
        %v589 = vpack.c.bf16 %v582, %v581
        %v590 = vpack.c.bf16 %v583, %v583
        %v591 = vld [vmem:[#allocation7] sm:$0xf]
        %v592 = vld [vmem:[#allocation7 + $0x4] sm:$0xf]
        %v593 = vld [vmem:[#allocation7 + $0x8] sm:$0xf]
        %v594 = vld [vmem:[#allocation7 + $0xc] sm:$0xf]
        %v595 = vld [vmem:[#allocation7 + $0x10] sm:$0xf]
        %v596 = vld [vmem:[#allocation7 + $0x14] sm:$0xf]
        %v597 = vld [vmem:[#allocation7 + $0x18] sm:$0xf]
        %v598 = vld [vmem:[#allocation7 + $0x1c] sm:$0xf]
        %v599 = vld [vmem:[#allocation7 + $0x20] sm:$0xf]
        %v600 = vld [vmem:[#allocation7 + $0x24] sm:$0xf]
        %v601 = vld [vmem:[#allocation7 + $0x28] sm:$0xf]
        %v602 = vld [vmem:[#allocation7 + $0x2c] sm:$0xf]
        %v603 = vld [vmem:[#allocation7 + $0x30] sm:$0xf]
        %v604 = vld [vmem:[#allocation7 + $0x34] sm:$0xf]
        %v605 = vld [vmem:[#allocation7 + $0x38] sm:$0xf]
        %v606 = vld [vmem:[#allocation7 + $0x3c] sm:$0xf]
        %v607 = vld [vmem:[%s4] sm:$0x1]
        %v609 = vlaneseq
        %v610 = vshrl.u32 %v609, 7
        %v611 = vsub.s32 0, %v610
        %v612 = vrot.slane %v607, %v611
        %v630 = vunpack.c.l.b16 %v591
        %v631 = vunpack.c.l.b16 %v592
        %v632 = vunpack.c.l.b16 %v593
        %v633 = vunpack.c.l.b16 %v594
        %v634 = vunpack.c.l.b16 %v595
        %v635 = vunpack.c.l.b16 %v596
        %v636 = vunpack.c.l.b16 %v597
        %v637 = vunpack.c.l.b16 %v598
        %v638 = vunpack.c.l.b16 %v599
        %v639 = vunpack.c.l.b16 %v600
        %v640 = vunpack.c.l.b16 %v601
        %v641 = vunpack.c.l.b16 %v602
        %v642 = vunpack.c.l.b16 %v603
        %v643 = vunpack.c.l.b16 %v604
        %v644 = vunpack.c.l.b16 %v605
        %v645 = vunpack.c.l.b16 %v606
        %v646 = vpack.c.b16 %v631, %v630
        %v647 = vpack.c.b16 %v633, %v632
        %v648 = vpack.c.b16 %v635, %v634
        %v649 = vpack.c.b16 %v637, %v636
        %v650 = vpack.c.b16 %v639, %v638
        %v651 = vpack.c.b16 %v641, %v640
        %v652 = vpack.c.b16 %v643, %v642
        %v653 = vpack.c.b16 %v645, %v644
        %662 = vmatprep.subr.bf16.mxu0 0
        %663 = vmatpush1.bf16.msra.mxu0 %v646
        %664 = vmatprep.subr.bf16.mxu0 0
        %665 = vmatpush1.bf16.msra.mxu0 %v647
        %666 = vmatprep.subr.bf16.mxu0 0
        %667 = vmatpush1.bf16.msra.mxu0 %v648
        %668 = vmatprep.subr.bf16.mxu0 0
        %669 = vmatpush1.bf16.msra.mxu0 %v649
        %670 = vmatprep.subr.bf16.mxu0 0
        %671 = vmatpush1.bf16.msra.mxu0 %v650
        %672 = vmatprep.subr.bf16.mxu0 0
        %673 = vmatpush1.bf16.msra.mxu0 %v651
        %674 = vmatprep.subr.bf16.mxu0 0
        %675 = vmatpush1.bf16.msra.mxu0 %v652
        %676 = vmatprep.subr.bf16.mxu0 0
        %677 = vmatpush1.bf16.msra.mxu0 %v653
        %678 = vmatprep.subr.bf16.mxu0 0
        %679 = vmatpush1.bf16.msra.mxu0 0
        %680 = vmatprep.subr.bf16.mxu0 0
        %681 = vmatpush1.bf16.msra.mxu0 0
        %682 = vmatprep.subr.bf16.mxu0 0
        %683 = vmatpush1.bf16.msra.mxu0 0
        %684 = vmatprep.subr.bf16.mxu0 0
        %685 = vmatpush1.bf16.msra.mxu0 0
        %686 = vmatprep.subr.bf16.mxu0 0
        %687 = vmatpush1.bf16.msra.mxu0 0
        %688 = vmatprep.subr.bf16.mxu0 0
        %689 = vmatpush1.bf16.msra.mxu0 0
        %690 = vmatprep.subr.bf16.mxu0 0
        %691 = vmatpush1.bf16.msra.mxu0 0
        %692 = vmatprep.subr.bf16.mxu0 0
        %693 = vmatpush1.bf16.msra.mxu0 0
        %694 = vmatprep.mubr.bf16.mxu0 0
        %695 = vmatmul.mubr.bf16.gmra.mrb[0].mxu0 %v584
        %v696 = vpop.f32.mrb[0].mxu0
        %v697 = vadd.f32 %v612, %v696
        %v698 = vpop.f32.mrb[0].mxu0
        %v699 = vpop.f32.mrb[0].mxu0
        %v700 = vadd.f32 %v612, %v699
        %v701 = vpop.f32.mrb[0].mxu0
        %702 = vmatprep.mubr.bf16.mxu0 0
        %703 = vmatmul.mubr.bf16.gmra.mrb[0].mxu0 %v585
        %v704 = vpop.f32.mrb[0].mxu0
        %v705 = vadd.f32 %v612, %v704
        %v706 = vpop.f32.mrb[0].mxu0
        %v707 = vpop.f32.mrb[0].mxu0
        %v708 = vadd.f32 %v612, %v707
        %v709 = vpop.f32.mrb[0].mxu0
        %710 = vmatprep.mubr.bf16.mxu0 0
        %711 = vmatmul.mubr.bf16.gmra.mrb[0].mxu0 %v586
        %v712 = vpop.f32.mrb[0].mxu0
        %v713 = vadd.f32 %v612, %v712
        %v714 = vpop.f32.mrb[0].mxu0
        %v715 = vpop.f32.mrb[0].mxu0
        %v716 = vadd.f32 %v612, %v715
        %v717 = vpop.f32.mrb[0].mxu0
        %718 = vmatprep.mubr.bf16.mxu0 0
        %719 = vmatmul.mubr.bf16.gmra.mrb[0].mxu0 %v587
        %v720 = vpop.f32.mrb[0].mxu0
        %v721 = vadd.f32 %v612, %v720
        %v722 = vpop.f32.mrb[0].mxu0
        %v723 = vpop.f32.mrb[0].mxu0
        %v724 = vadd.f32 %v612, %v723
        %v725 = vpop.f32.mrb[0].mxu0
        %726 = vmatprep.mubr.bf16.mxu0 0
        %727 = vmatmul.mubr.bf16.gmra.mrb[0].mxu0 %v588
        %v728 = vpop.f32.mrb[0].mxu0
        %v729 = vadd.f32 %v612, %v728
        %v730 = vpop.f32.mrb[0].mxu0
        %v731 = vpop.f32.mrb[0].mxu0
        %v732 = vadd.f32 %v612, %v731
        %v733 = vpop.f32.mrb[0].mxu0
        %734 = vmatprep.mubr.bf16.mxu0 0
        %735 = vmatmul.mubr.bf16.gmra.mrb[0].mxu0 %v589
        %v736 = vpop.f32.mrb[0].mxu0
        %v737 = vadd.f32 %v612, %v736
        %v738 = vpop.f32.mrb[0].mxu0
        %v739 = vpop.f32.mrb[0].mxu0
        %v740 = vadd.f32 %v612, %v739
        %v741 = vpop.f32.mrb[0].mxu0
        %742 = vmatprep.mubr.bf16.mxu0 0
        %743 = vmatmul.mubr.bf16.gmra.mrb[0].mxu0 %v590
        %v744 = vpop.f32.mrb[0].mxu0
        %v745 = vadd.f32 %v612, %v744
        %v746 = vpop.f32.mrb[0].mxu0
        %v747 = vpop.f32.mrb[0].mxu0
        %v748 = vpop.f32.mrb[0].mxu0
        %749 = vdwg.mxu0
        %vm750 = vcmp.gt.f32.partialorder %v697, 0.0
        %vm751 = vcmp.gt.f32.partialorder %v700, 0.0
        %vm752 = vcmp.gt.f32.partialorder %v705, 0.0
        %vm753 = vcmp.gt.f32.partialorder %v708, 0.0
        %vm754 = vcmp.gt.f32.partialorder %v713, 0.0
        %vm755 = vcmp.gt.f32.partialorder %v716, 0.0
        %vm756 = vcmp.gt.f32.partialorder %v721, 0.0
        %vm757 = vcmp.gt.f32.partialorder %v724, 0.0
        %vm758 = vcmp.gt.f32.partialorder %v729, 0.0
        %vm759 = vcmp.gt.f32.partialorder %v732, 0.0
        %vm760 = vcmp.gt.f32.partialorder %v737, 0.0
        %vm761 = vcmp.gt.f32.partialorder %v740, 0.0
        %vm762 = vcmp.gt.f32.partialorder %v745, 0.0
        %v763 = vmul.f32 %v697, 0.2
        %v764 = vmul.f32 %v700, 0.2
        %v765 = vmul.f32 %v705, 0.2
        %v766 = vmul.f32 %v708, 0.2
        %v767 = vmul.f32 %v713, 0.2
        %v768 = vmul.f32 %v716, 0.2
        %v769 = vmul.f32 %v721, 0.2
        %v770 = vmul.f32 %v724, 0.2
        %v771 = vmul.f32 %v729, 0.2
        %v772 = vmul.f32 %v732, 0.2
        %v773 = vmul.f32 %v737, 0.2
        %v774 = vmul.f32 %v740, 0.2
        %v775 = vmul.f32 %v745, 0.2
        %v776 = vsel %vm750, %v697, %v763
        %v777 = vsel %vm751, %v700, %v764
        %v778 = vsel %vm752, %v705, %v765
        %v779 = vsel %vm753, %v708, %v766
        %v780 = vsel %vm754, %v713, %v767
        %v781 = vsel %vm755, %v716, %v768
        %v782 = vsel %vm756, %v721, %v769
        %v783 = vsel %vm757, %v724, %v770
        %v784 = vsel %vm758, %v729, %v771
        %v785 = vsel %vm759, %v732, %v772
        %v786 = vsel %vm760, %v737, %v773
        %v787 = vsel %vm761, %v740, %v774
        %v788 = vsel %vm762, %v745, %v775
        %v789 = vld [vmem:[%s5] sm:$0x1]
        %v791 = vlaneseq
        %v792 = vshrl.u32 %v791, 7
        %v793 = vsub.s32 0, %v792
        %v794 = vrot.slane %v789, %v793
        %v796 = vmul.f32 %v776, %v794
        %v797 = vmul.f32 %v777, %v794
        %v798 = vmul.f32 %v778, %v794
        %v799 = vmul.f32 %v779, %v794
        %v800 = vmul.f32 %v780, %v794
        %v801 = vmul.f32 %v781, %v794
        %v802 = vmul.f32 %v782, %v794
        %v803 = vmul.f32 %v783, %v794
        %v804 = vmul.f32 %v784, %v794
        %v805 = vmul.f32 %v785, %v794
        %v806 = vmul.f32 %v786, %v794
        %v807 = vmul.f32 %v787, %v794
        %v808 = vmul.f32 %v788, %v794
        %809 = vadd.xlane.f32.xlu0 %v796
        %v810 = vpop.xlane.xlu0 %809
        %811 = vadd.xlane.f32.xlu0 %v797
        %v812 = vpop.xlane.xlu0 %811
        %813 = vadd.xlane.f32.xlu0 %v798
        %v814 = vpop.xlane.xlu0 %813
        %815 = vadd.xlane.f32.xlu0 %v799
        %v816 = vpop.xlane.xlu0 %815
        %817 = vadd.xlane.f32.xlu0 %v800
        %v818 = vpop.xlane.xlu0 %817
        %819 = vadd.xlane.f32.xlu0 %v801
        %v820 = vpop.xlane.xlu0 %819
        %821 = vadd.xlane.f32.xlu0 %v802
        %v822 = vpop.xlane.xlu0 %821
        %823 = vadd.xlane.f32.xlu0 %v803
        %v824 = vpop.xlane.xlu0 %823
        %825 = vadd.xlane.f32.xlu0 %v804
        %v826 = vpop.xlane.xlu0 %825
        %827 = vadd.xlane.f32.xlu0 %v805
        %v828 = vpop.xlane.xlu0 %827
        %829 = vadd.xlane.f32.xlu0 %v806
        %v830 = vpop.xlane.xlu0 %829
        %831 = vadd.xlane.f32.xlu0 %v807
        %v832 = vpop.xlane.xlu0 %831
        %833 = vadd.xlane.f32.xlu0 %v808
        %v834 = vpop.xlane.xlu0 %833
        %v835 = vld [vmem:[#allocation2] sm:$0x1]
        %v837 = vlaneseq
        %v838 = vshrl.u32 %v837, 7
        %v839 = vsub.s32 0, %v838
        %v840 = vrot.slane %v835, %v839
        %v842 = vadd.f32 %v810, %v840
        %v843 = vadd.f32 %v812, %v840
        %v844 = vadd.f32 %v814, %v840
        %v845 = vadd.f32 %v816, %v840
        %v846 = vadd.f32 %v818, %v840
        %v847 = vadd.f32 %v820, %v840
        %v848 = vadd.f32 %v822, %v840
        %v849 = vadd.f32 %v824, %v840
        %v850 = vadd.f32 %v826, %v840
        %v851 = vadd.f32 %v828, %v840
        %v852 = vadd.f32 %v830, %v840
        %v853 = vadd.f32 %v832, %v840
        %v854 = vadd.f32 %v834, %v840
        %v855 = vand.u32 2147483647, %v842
        %v856 = vand.u32 2147483647, %v843
        %v857 = vand.u32 2147483647, %v844
        %v858 = vand.u32 2147483647, %v845
        %v859 = vand.u32 2147483647, %v846
        %v860 = vand.u32 2147483647, %v847
        %v861 = vand.u32 2147483647, %v848
        %v862 = vand.u32 2147483647, %v849
        %v863 = vand.u32 2147483647, %v850
        %v864 = vand.u32 2147483647, %v851
        %v865 = vand.u32 2147483647, %v852
        %v866 = vand.u32 2147483647, %v853
        %v867 = vand.u32 2147483647, %v854
        %v868 = vsub.f32 0.0, %v855
        %v869 = vsub.f32 0.0, %v856
        %v870 = vsub.f32 0.0, %v857
        %v871 = vsub.f32 0.0, %v858
        %v872 = vsub.f32 0.0, %v859
        %v873 = vsub.f32 0.0, %v860
        %v874 = vsub.f32 0.0, %v861
        %v875 = vsub.f32 0.0, %v862
        %v876 = vsub.f32 0.0, %v863
        %v877 = vsub.f32 0.0, %v864
        %v878 = vsub.f32 0.0, %v865
        %v879 = vsub.f32 0.0, %v866
        %v880 = vsub.f32 0.0, %v867
        %v881 = vmul.f32 %v868, 1.442695
        %v882 = vpow.pop %v881
        %v883 = vmul.f32 %v869, 1.442695
        %v884 = vpow.pop %v883
        %v885 = vmul.f32 %v870, 1.442695
        %v886 = vpow.pop %v885
        %v887 = vmul.f32 %v871, 1.442695
        %v888 = vpow.pop %v887
        %v889 = vmul.f32 %v872, 1.442695
        %v890 = vpow.pop %v889
        %v891 = vmul.f32 %v873, 1.442695
        %v892 = vpow.pop %v891
        %v893 = vmul.f32 %v874, 1.442695
        %v894 = vpow.pop %v893
        %v895 = vmul.f32 %v875, 1.442695
        %v896 = vpow.pop %v895
        %v897 = vmul.f32 %v876, 1.442695
        %v898 = vpow.pop %v897
        %v899 = vmul.f32 %v877, 1.442695
        %v900 = vpow.pop %v899
        %v901 = vmul.f32 %v878, 1.442695
        %v902 = vpow.pop %v901
        %v903 = vmul.f32 %v879, 1.442695
        %v904 = vpow.pop %v903
        %v905 = vmul.f32 %v880, 1.442695
        %v906 = vpow.pop %v905
        %vm907 = vcmp.ge.f32.partialorder %v842, 0.0
        %vm908 = vcmp.ge.f32.partialorder %v843, 0.0
        %vm909 = vcmp.ge.f32.partialorder %v844, 0.0
        %vm910 = vcmp.ge.f32.partialorder %v845, 0.0
        %vm911 = vcmp.ge.f32.partialorder %v846, 0.0
        %vm912 = vcmp.ge.f32.partialorder %v847, 0.0
        %vm913 = vcmp.ge.f32.partialorder %v848, 0.0
        %vm914 = vcmp.ge.f32.partialorder %v849, 0.0
        %vm915 = vcmp.ge.f32.partialorder %v850, 0.0
        %vm916 = vcmp.ge.f32.partialorder %v851, 0.0
        %vm917 = vcmp.ge.f32.partialorder %v852, 0.0
        %vm918 = vcmp.ge.f32.partialorder %v853, 0.0
        %vm919 = vcmp.ge.f32.partialorder %v854, 0.0
        %v920 = vsel %vm907, 1.0, %v882
        %v921 = vsel %vm908, 1.0, %v884
        %v922 = vsel %vm909, 1.0, %v886
        %v923 = vsel %vm910, 1.0, %v888
        %v924 = vsel %vm911, 1.0, %v890
        %v925 = vsel %vm912, 1.0, %v892
        %v926 = vsel %vm913, 1.0, %v894
        %v927 = vsel %vm914, 1.0, %v896
        %v928 = vsel %vm915, 1.0, %v898
        %v929 = vsel %vm916, 1.0, %v900
        %v930 = vsel %vm917, 1.0, %v902
        %v931 = vsel %vm918, 1.0, %v904
        %v932 = vsel %vm919, 1.0, %v906
        %v933 = vadd.f32 %v882, 1.0
        %v934 = vadd.f32 %v884, 1.0
        %v935 = vadd.f32 %v886, 1.0
        %v936 = vadd.f32 %v888, 1.0
        %v937 = vadd.f32 %v890, 1.0
        %v938 = vadd.f32 %v892, 1.0
        %v939 = vadd.f32 %v894, 1.0
        %v940 = vadd.f32 %v896, 1.0
        %v941 = vadd.f32 %v898, 1.0
        %v942 = vadd.f32 %v900, 1.0
        %v943 = vadd.f32 %v902, 1.0
        %v944 = vadd.f32 %v904, 1.0
        %v945 = vadd.f32 %v906, 1.0
        %v946 = vrcp.pop %v933
        %v947 = vmul.f32 %v920, %v946
        %v948 = vrcp.pop %v934
        %v949 = vmul.f32 %v921, %v948
        %v950 = vrcp.pop %v935
        %v951 = vmul.f32 %v922, %v950
        %v952 = vrcp.pop %v936
        %v953 = vmul.f32 %v923, %v952
        %v954 = vrcp.pop %v937
        %v955 = vmul.f32 %v924, %v954
        %v956 = vrcp.pop %v938
        %v957 = vmul.f32 %v925, %v956
        %v958 = vrcp.pop %v939
        %v959 = vmul.f32 %v926, %v958
        %v960 = vrcp.pop %v940
        %v961 = vmul.f32 %v927, %v960
        %v962 = vrcp.pop %v941
        %v963 = vmul.f32 %v928, %v962
        %v964 = vrcp.pop %v942
        %v965 = vmul.f32 %v929, %v964
        %v966 = vrcp.pop %v943
        %v967 = vmul.f32 %v930, %v966
        %v968 = vrcp.pop %v944
        %v969 = vmul.f32 %v931, %v968
        %v970 = vrcp.pop %v945
        %v971 = vmul.f32 %v932, %v970
        %vm972 = vcmask 7168
        %973 = vst.msk [vmem:[%s330] sm:$0xff] %vm972, %v947
        %974 = vst.msk [vmem:[%s330 + $0x8] sm:$0xff] %vm972, %v949
        %975 = vst.msk [vmem:[%s330 + $0x10] sm:$0xff] %vm972, %v951
        %976 = vst.msk [vmem:[%s330 + $0x18] sm:$0xff] %vm972, %v953
        %977 = vst.msk [vmem:[%s330 + $0x20] sm:$0xff] %vm972, %v955
        %978 = vst.msk [vmem:[%s330 + $0x28] sm:$0xff] %vm972, %v957
        %979 = vst.msk [vmem:[%s330 + $0x30] sm:$0xff] %vm972, %v959
        %980 = vst.msk [vmem:[%s330 + $0x38] sm:$0xff] %vm972, %v961
        %981 = vst.msk [vmem:[%s330 + $0x40] sm:$0xff] %vm972, %v963
        %982 = vst.msk [vmem:[%s330 + $0x48] sm:$0xff] %vm972, %v965
        %983 = vst.msk [vmem:[%s330 + $0x50] sm:$0xff] %vm972, %v967
        %984 = vst.msk [vmem:[%s330 + $0x58] sm:$0xff] %vm972, %v969
        %985 = vst.msk [vmem:[%s330 + $0x60] sm:$0xff] %vm972, %v971
        %s986 = smul.u32 13, %s24
        %p987 = scmp.lt.s32.totalorder %s986, 25
        %s988 = scalar_select %p987, %s986, 25
        %s989 = smul.addr %s988, 8
        %s990 = scalar_lea.vmem %s7, %s989
        // Predicated region
        $region61: #{tpu_custom_call.1} parent=47 // pred_check
          %p991 = pneg %p194
        $region62: #{tpu_custom_call.1} parent=47 // pred_check_branch
          %993 = sbr.rel (%p991) target = $region64
        $region63: #{tpu_custom_call.1} parent=47 // pred_region
          %s994 = smul.u32 13, %s24
        $region64: #{tpu_custom_call.1} parent=47 // pred_fallthru
          _
      $region48: #{tpu_custom_call.1} parent=5 // pred_fallthru
        _
      %p995 = scmp.le.s32.totalorder 2, %s19
      // Predicated region
      $region65: #{tpu_custom_call.1} parent=5 // pred_check
        %p996 = pneg %p995
      $region66: #{tpu_custom_call.1} parent=5 // pred_check_branch
        %998 = sbr.rel (%p996) target = $region68
      $region67: #{tpu_custom_call.1} parent=5 // pred_region
        %s999 = ssub.s32 %s19, 2
        // Predicated region
        $region69: #{tpu_custom_call.1} parent=67 // pred_check
          %p1000 = pneg %p200
        $region70: #{tpu_custom_call.1} parent=67 // pred_check_branch
          %1002 = sbr.rel (%p1000) target = $region72
        $region71: #{tpu_custom_call.1} parent=67 // pred_region
          %s1003 = smul.u32 13, %s25
          %p1004 = scmp.lt.s32.totalorder %s1003, 25
          %s1005 = scalar_select %p1004, %s1003, 25
          %s1006 = smul.addr %s1005, 8
          %s1007 = scalar_lea.vmem %s7, %s1006
        $region72: #{tpu_custom_call.1} parent=67 // pred_fallthru
          _
      $region68: #{tpu_custom_call.1} parent=5 // pred_fallthru
        _
    $region6: #{tpu_custom_call.1} parent=1 // loop_footer
      %s23 = sadd.s32 1, %s19
    $region7: #{tpu_custom_call.1} parent=1 // loop_footer_branch
      %18 = sbr.rel target = $region3
    $region8: #{tpu_custom_call.1} parent=1 // loop_exit
      _
    %1008 = vsyncpa [#allocation4], 1
    %s1009 = scalar_lea.sflag [#allocation4], 1
    %1010 = vsyncpa %s1009, 1
    %1011 = vsyncpa [#allocation6], 1

</llo_original>
